<compile_context>
chip_gen: v7x
topology: tpu7x:2x2x1
jax: 0.10.0
libtpu: 0.0.40
codegen_flags: <defaults>
</compile_context>

<pallas_src>
import jax
import jax.numpy as jnp
from jax.experimental import pallas as pl
from jax.experimental.pallas import tpu as pltpu


def _round_up(x, m):
    return ((x + m - 1) // m) * m


def _embed_kernel(m_ref, r_ref, w_ref, b_ref, o_ref):
    # m_ref, r_ref: (TB, 1)   w_ref: (2, Dp)   b_ref: (1, Dp)   o_ref: (TB, Dp)
    m = m_ref[...].astype(jnp.float32)           # (TB, 1)  sublane column
    r = r_ref[...].astype(jnp.float32)           # (TB, 1)
    w0 = w_ref[0:1, :].astype(jnp.float32)       # (1, Dp)  lane-dense row
    w1 = w_ref[1:2, :].astype(jnp.float32)       # (1, Dp)
    b = b_ref[...].astype(jnp.float32)           # (1, Dp)
    # Pure VPU broadcast-FMA; no MXU involvement.
    out = m * w0 + r * w1 + b                    # (TB, Dp)
    o_ref[...] = out.astype(o_ref.dtype)


def prepare_params(weight, bias):
    """One-time layout plumbing for the nn.Linear(2, d_model) parameters.

    weight : (d_model, 2)  PyTorch nn.Linear layout
    bias   : (d_model,)
    Returns (w_rows (2, Dp) f32, b_row (1, Dp) f32, d_model) with Dp a
    multiple of 128 (zero-padded) so kernel stores are lane-dense.
    """
    d_model = weight.shape[0]
    d_pad = _round_up(max(d_model, 128), 128)
    w_rows = jnp.zeros((2, d_pad), jnp.float32).at[:, :d_model].set(
        weight.T.astype(jnp.float32))
    b_row = jnp.zeros((1, d_pad), jnp.float32).at[:, :d_model].set(
        bias.astype(jnp.float32))
    return w_rows, b_row, d_model


def global_feature_embedding(mach, reynolds, w_rows, b_row, d_model,
                             *, out_dtype=jnp.float32):
    """
    mach, reynolds : (batch,) float
    w_rows         : (2, d_pad) float32   from prepare_params
    b_row          : (1, d_pad) float32   from prepare_params
    returns        : (batch, d_model) out_dtype
    """
    assert mach.shape == reynolds.shape and mach.ndim == 1
    batch = mach.shape[0]
    d_pad = w_rows.shape[1]

    # Batch tile: amortize per-step overhead, but cap the per-buffer output
    # tile at ~4 MiB so double buffering fits comfortably even on v7x (64 MiB
    # VMEM, 32 MiB scoped default). TB is a multiple of 8 (sublane rule).
    max_tb_by_vmem = max(8, (4 * 1024 * 1024) // (d_pad * 4))
    tb = min(1024, _round_up(max_tb_by_vmem, 8) if max_tb_by_vmem >= 8 else 8,
             _round_up(batch, 8))
    tb = max(8, (tb // 8) * 8)
    b_pad = _round_up(batch, tb)

    # Feed mach / reynolds directly as (B, 1) columns (no stack, no (B,2) tile).
    m2 = mach.reshape(batch, 1).astype(jnp.float32)
    r2 = reynolds.reshape(batch, 1).astype(jnp.float32)
    if b_pad != batch:
        pad = ((0, b_pad - batch), (0, 0))
        m2 = jnp.pad(m2, pad)
        r2 = jnp.pad(r2, pad)

    grid = (b_pad // tb,)

    out = pl.pallas_call(
        _embed_kernel,
        out_shape=jax.ShapeDtypeStruct((b_pad, d_pad), out_dtype),
        grid_spec=pltpu.PrefetchScalarGridSpec(
            num_scalar_prefetch=0,
            grid=grid,
            in_specs=[
                pl.BlockSpec((tb, 1), lambda i: (i, 0)),       # mach column
                pl.BlockSpec((tb, 1), lambda i: (i, 0)),       # reynolds column
                pl.BlockSpec((2, d_pad), lambda i: (0, 0)),    # weight rows (resident)
                pl.BlockSpec((1, d_pad), lambda i: (0, 0)),    # bias row (resident)
            ],
            out_specs=pl.BlockSpec((tb, d_pad), lambda i: (i, 0)),
        ),
        compiler_params=pltpu.CompilerParams(
            dimension_semantics=("parallel",),                 # batch loop; 2 TCs on v7x
        ),
    )(m2, r2, w_rows, b_row)

    # Strip the lane / batch padding back off.
    if b_pad != batch or d_pad != d_model:
        out = out[:batch, :d_model]
    return out


def _reference(mach, reynolds, weight, bias):
    x = jnp.stack([mach, reynolds], axis=-1)
    return x @ weight.T + bias


if __name__ == "__main__":
    key = jax.random.PRNGKey(0)
    k_m, k_r, k_w, k_b = jax.random.split(key, 4)

    batch = 8
    d_model = 32

    mach = jax.random.uniform(k_m, (batch,), dtype=jnp.float32)
    reynolds = jax.random.uniform(k_r, (batch,), dtype=jnp.float32)

    # nn.Linear(2, d_model) shapes: W (d_model, 2), b (d_model,)
    bound = 1.0 / (2.0 ** 0.5)
    weight = jax.random.uniform(k_w, (d_model, 2), minval=-bound, maxval=bound,
                                dtype=jnp.float32)
    bias = jax.random.uniform(k_b, (d_model,), minval=-bound, maxval=bound,
                              dtype=jnp.float32)

    # One-time parameter layout prep (transpose + lane padding).
    w_rows, b_row, d_model = prepare_params(weight, bias)

    out = global_feature_embedding(mach, reynolds, w_rows, b_row, d_model)
    out = jax.block_until_ready(out)

    ref = _reference(mach, reynolds, weight, bias)
    assert out.shape == (batch, d_model)
    assert jnp.allclose(out, ref, atol=1e-5, rtol=1e-5), "mismatch vs reference"

    print("KERNEL_OK")
</pallas_src>

<mosaic_0001>
module attributes {stable_mosaic.version = 11 : i64} {
  func.func @_embed_kernel(%arg0: i32, %arg1: memref<8x1xf32, #tpu.memory_space<vmem>>, %arg2: memref<8x1xf32, #tpu.memory_space<vmem>>, %arg3: memref<2x128xf32, #tpu.memory_space<vmem>>, %arg4: memref<1x128xf32, #tpu.memory_space<vmem>>, %arg5: memref<8x128xf32, #tpu.memory_space<vmem>>) attributes {dimension_semantics = [#tpu.dimension_semantics<parallel>], iteration_bounds = array<i64: 1>, scalar_prefetch = 0 : i64, scratch_operands = 0 : i64, tpu.core_type = #tpu.core_type<tc>, window_params = [{transform_indices = @transform_0, window_bounds = array<i64: 8, 1>}, {transform_indices = @transform_1, window_bounds = array<i64: 8, 1>}, {pipeline_mode = #tpu.pipeline_mode<synchronous>, transform_indices = @transform_2, window_bounds = array<i64: 2, 128>}, {pipeline_mode = #tpu.pipeline_mode<synchronous>, transform_indices = @transform_3, window_bounds = array<i64: 1, 128>}, {transform_indices = @transform_4, window_bounds = array<i64: 8, 128>}]} {
    %c0 = arith.constant 0 : index
    %c0_0 = arith.constant 0 : index
    %0 = vector.load %arg1[%c0, %c0_0] : memref<8x1xf32, #tpu.memory_space<vmem>>, vector<8x1xf32>
    %c0_1 = arith.constant 0 : index
    %c0_2 = arith.constant 0 : index
    %1 = vector.load %arg2[%c0_1, %c0_2] : memref<8x1xf32, #tpu.memory_space<vmem>>, vector<8x1xf32>
    %c0_3 = arith.constant 0 : index
    %c0_4 = arith.constant 0 : index
    %2 = vector.load %arg3[%c0_3, %c0_4] : memref<2x128xf32, #tpu.memory_space<vmem>>, vector<1x128xf32>
    %c1 = arith.constant 1 : index
    %c0_5 = arith.constant 0 : index
    %3 = vector.load %arg3[%c1, %c0_5] : memref<2x128xf32, #tpu.memory_space<vmem>>, vector<1x128xf32>
    %c0_6 = arith.constant 0 : index
    %c0_7 = arith.constant 0 : index
    %4 = vector.load %arg4[%c0_6, %c0_7] : memref<1x128xf32, #tpu.memory_space<vmem>>, vector<1x128xf32>
    %5 = vector.broadcast %0 : vector<8x1xf32> to vector<8x128xf32>
    %6 = vector.broadcast %2 : vector<1x128xf32> to vector<8x128xf32>
    %7 = arith.mulf %5, %6 : vector<8x128xf32>
    %8 = vector.broadcast %1 : vector<8x1xf32> to vector<8x128xf32>
    %9 = vector.broadcast %3 : vector<1x128xf32> to vector<8x128xf32>
    %10 = arith.mulf %8, %9 : vector<8x128xf32>
    %11 = arith.addf %7, %10 : vector<8x128xf32>
    %12 = vector.broadcast %4 : vector<1x128xf32> to vector<8x128xf32>
    %13 = arith.addf %11, %12 : vector<8x128xf32>
    %c0_8 = arith.constant 0 : index
    %c0_9 = arith.constant 0 : index
    %14 = vector.load %arg5[%c0_8, %c0_9] : memref<8x128xf32, #tpu.memory_space<vmem>>, vector<8x128xf32>
    tpu.vector_store %arg5[%c0_8, %c0_9], %13 {strides = array<i32>} : memref<8x128xf32, #tpu.memory_space<vmem>>, vector<8x128xf32>,
    return
  }
  func.func @transform_0(%arg0: i32) -> (i32, i32) {
    %c0_i32 = arith.constant 0 : i32
    %c0_i32_0 = arith.constant 0 : i32
    return %arg0, %c0_i32 : i32, i32
  }
  func.func @transform_1(%arg0: i32) -> (i32, i32) {
    %c0_i32 = arith.constant 0 : i32
    %c0_i32_0 = arith.constant 0 : i32
    return %arg0, %c0_i32 : i32, i32
  }
  func.func @transform_2(%arg0: i32) -> (i32, i32) {
    %c0_i32 = arith.constant 0 : i32
    %c0_i32_0 = arith.constant 0 : i32
    %c0_i32_1 = arith.constant 0 : i32
    return %c0_i32, %c0_i32_0 : i32, i32
  }
  func.func @transform_3(%arg0: i32) -> (i32, i32) {
    %c0_i32 = arith.constant 0 : i32
    %c0_i32_0 = arith.constant 0 : i32
    %c0_i32_1 = arith.constant 0 : i32
    return %c0_i32, %c0_i32_0 : i32, i32
  }
  func.func @transform_4(%arg0: i32) -> (i32, i32) {
    %c0_i32 = arith.constant 0 : i32
    %c0_i32_0 = arith.constant 0 : i32
    return %arg0, %c0_i32 : i32, i32
  }
}

</mosaic_0001>

<llo_original>
// kernel: tpu_custom_call.1
$region0: #{tpu_custom_call.1}
  #allocation0 [shape = 'u32[]', space=smem, size = 0x4, offset = 0x4, fixed_abs, tag = 'smem constant byte address 0x4 - core index']
  #allocation1 [shape = 'u32[144,128]{1,0:T(1,128)}', space=vmem, size = 0x12000, scoped, tag = 'internal scratch']
  %s0 = inlined_call_operand.vmem [shape: f32[8,1], index: 0, kind: input, shape index: {}]
  %s1 = inlined_call_operand.vmem [shape: f32[8,1], index: 1, kind: input, shape index: {}]
  %s2 = inlined_call_operand.vmem [shape: f32[2,128], index: 2, kind: input, shape index: {}]
  %s3 = inlined_call_operand.vmem [shape: f32[1,128], index: 3, kind: input, shape index: {}]
  %s4 = inlined_call_operand.hbm [shape: f32[8,128], index: 4, kind: output, shape index: {}]
  %s5 = sld [smem:[#allocation0]]
  $region26: #{tpu_custom_call.1} parent=0
    _
  %s7 = ssub.s32 1, %s5
  %s8 = scalar_select 0, %s7, %s5
  $region1: #{tpu_custom_call.1} parent=0
    #allocation2 [shape = 'u8[4096]{0}', space=vmem, size = 0x1000, scoped, tag = 'output window, operand 0, single buffered']
    #allocation3 [shape = 's32[1]{0}', space=sflag, size = 0x4, scoped, tag = 'scoped memory for tpu_custom_call.1']
    %9 = vsyncpa [#allocation3], 0
    // Predicated region
    $region2: #{tpu_custom_call.1} parent=1 // pred_check
      _
    $region3: #{tpu_custom_call.1} parent=1 // pred_check_branch
      %11 = sbr.rel (0) target = $region5
    $region4: #{tpu_custom_call.1} parent=1 // pred_region
      _
    $region5: #{tpu_custom_call.1} parent=1 // pred_fallthru
      _
    // Predicated region
    $region6: #{tpu_custom_call.1} parent=1 // pred_check
      _
    $region7: #{tpu_custom_call.1} parent=1 // pred_check_branch
      %13 = sbr.rel (0) target = $region9
    $region8: #{tpu_custom_call.1} parent=1 // pred_region
      _
    $region9: #{tpu_custom_call.1} parent=1 // pred_fallthru
      _
    // Predicated region
    $region10: #{tpu_custom_call.1} parent=1 // pred_check
      _
    $region11: #{tpu_custom_call.1} parent=1 // pred_check_branch
      %15 = sbr.rel (0) target = $region13
    $region12: #{tpu_custom_call.1} parent=1 // pred_region
      _
    $region13: #{tpu_custom_call.1} parent=1 // pred_fallthru
      _
    // Predicated region
    $region14: #{tpu_custom_call.1} parent=1 // pred_check
      _
    $region15: #{tpu_custom_call.1} parent=1 // pred_check_branch
      %17 = sbr.rel (0) target = $region17
    $region16: #{tpu_custom_call.1} parent=1 // pred_region
      _
    $region17: #{tpu_custom_call.1} parent=1 // pred_fallthru
      _
    %v18 = vld [vmem:[%s0] sm:$0xff]
    %v19 = vld [vmem:[%s1] sm:$0xff]
    %v20 = vld [vmem:[%s2] sm:$0x1]
    %v21 = vld [vmem:[%s2 + $0x1] sm:$0x1]
    %v22 = vld [vmem:[%s3] sm:$0x1]
    %24 = vset.pattern.permute.xlu0 0
    %25 = vperm.xlu0 %24, %v18
    %v26 = vpop.permute.xlu0 %25
    %v28 = vlaneseq
    %v29 = vshrl.u32 %v28, 7
    %v30 = vsub.s32 0, %v29
    %v31 = vrot.slane %v20, %v30
    %v32 = vmul.f32 %v26, %v31
    %34 = vset.pattern.permute.xlu0 0
    %35 = vperm.xlu0 %34, %v19
    %v36 = vpop.permute.xlu0 %35
    %v38 = vlaneseq
    %v39 = vshrl.u32 %v38, 7
    %v40 = vsub.s32 0, %v39
    %v41 = vrot.slane %v21, %v40
    %v42 = vmul.f32 %v36, %v41
    %v43 = vadd.f32 %v32, %v42
    %v45 = vlaneseq
    %v46 = vshrl.u32 %v45, 7
    %v47 = vsub.s32 0, %v46
    %v48 = vrot.slane %v22, %v47
    %v50 = vadd.f32 %v43, %v48
    %51 = vst [vmem:[#allocation2] sm:$0xff] %v50
    // Predicated region
    $region18: #{tpu_custom_call.1} parent=1 // pred_check
      _
    $region19: #{tpu_custom_call.1} parent=1 // pred_check_branch
      %53 = sbr.rel (0) target = $region21
    $region20: #{tpu_custom_call.1} parent=1 // pred_region
      %s55 = ssub.s32 128, 128
      %56 = vsyncadd [#allocation3], %s55
      %s58 = sshll.u32 [#allocation2], 4
      %s59 = int_to_ptr.vmem [resolvable:$true] %s58
      %61 = dma.vmem_to_hbm [thread:$0]  %s59, 128, %s4, [#allocation3]
    $region21: #{tpu_custom_call.1} parent=1 // pred_fallthru
      _
    // Predicated region
    $region22: #{tpu_custom_call.1} parent=1 // pred_check
      _
    $region23: #{tpu_custom_call.1} parent=1 // pred_check_branch
      %63 = sbr.rel (0) target = $region25
    $region24: #{tpu_custom_call.1} parent=1 // pred_region
      %64 = dma.done [#allocation3], 128
    $region25: #{tpu_custom_call.1} parent=1 // pred_fallthru
      _
    %65 = vsyncpa [#allocation3], 1

</llo_original>
